<compile_context>
chip_gen: v7x
topology: tpu7x:2x2x1
jax: 0.10.0
libtpu: 0.0.40
codegen_flags: <defaults>
</compile_context>

<pallas_src>
import math
from functools import partial

import jax
import jax.numpy as jnp
from jax import lax
from jax.experimental import pallas as pl
from jax.experimental.pallas import tpu as pltpu

_LANES = 128
_MAX_TILE_ROWS = 2048   # 2048*128*4B = 1 MiB per input buffer
_NUM_CORE_SPLITS = 2    # leading "parallel" grid axis (both TCs on v7x)


def _round_up(x, m):
    return (x + m - 1) // m * m


def _jsd_sums_kernel(scal_ref, real_ref, fake_ref, acc_r_ref, acc_f_ref, *,
                     tile_rows):
    """Accumulate per-core partial sums of log(real) and log(1 - fake).

    scal_ref (SMEM, int32[4]): [rows_real, rows_fake, nb_real-1, nb_fake-1]
    real_ref/fake_ref: (tile_rows, 128) input tiles (f32 or bf16)
    acc_r_ref/acc_f_ref: (1, 8, 128) f32 resident accumulators (one per core)
    """
    c = pl.program_id(0)          # core split index
    j = pl.program_id(1)          # tile index within this core
    tpc = pl.num_programs(1)      # tiles per core

    @pl.when(j == 0)
    def _():
        acc_r_ref[...] = jnp.zeros_like(acc_r_ref)
        acc_f_ref[...] = jnp.zeros_like(acc_f_ref)

    # Global (unclamped) tile index and row offset. The index_maps clamp the
    # block index, so out-of-range / partial tiles are handled purely by the
    # row mask below (masked rows contribute log(1) = 0).
    t = c * tpc + j
    base = t * tile_rows
    row = lax.broadcasted_iota(jnp.int32, (tile_rows, _LANES), 0) + base

    xr = real_ref[...].astype(jnp.float32)
    xf = fake_ref[...].astype(jnp.float32)

    lr = jnp.log(jnp.where(row < scal_ref[0], xr, 1.0))
    lf = jnp.log(jnp.where(row < scal_ref[1], 1.0 - xf, 1.0))

    # Fold tile into the (8,128) vector accumulators with pure VPU adds.
    acc_r_ref[0] += lr.reshape(tile_rows // 8, 8, _LANES).sum(axis=0)
    acc_f_ref[0] += lf.reshape(tile_rows // 8, 8, _LANES).sum(axis=0)


def _to_slab(x, neutral):
    """Flatten to a (rows, 128) slab; tail-pad (<128 elems) with a neutral value."""
    if x.dtype != jnp.float32 and x.dtype != jnp.bfloat16:
        x = x.astype(jnp.float32)
    flat = x.reshape(-1)
    n = flat.shape[0]
    padded = _round_up(n, _LANES)
    if padded != n:
        flat = jnp.pad(flat, (0, padded - n), constant_values=neutral)
    return flat.reshape(-1, _LANES), n


@jax.jit
def jsd_loss(real, fake):
    real2d, n_real = _to_slab(real, 1.0)   # log(1) = 0 neutral pad
    fake2d, n_fake = _to_slab(fake, 0.0)   # log(1-0) = 0 neutral pad

    rows_real = real2d.shape[0]
    rows_fake = fake2d.shape[0]
    max_rows = max(rows_real, rows_fake)

    # Sublane granularity: 8 for f32 tiles, 16 if any bf16 slab is present.
    sub = 16 if (real2d.dtype == jnp.bfloat16 or fake2d.dtype == jnp.bfloat16) else 8
    tile_rows = min(_MAX_TILE_ROWS, _round_up(max_rows, sub))

    nb_real = pl.cdiv(rows_real, tile_rows)
    nb_fake = pl.cdiv(rows_fake, tile_rows)
    num_tiles = max(nb_real, nb_fake)
    tiles_per_core = pl.cdiv(num_tiles, _NUM_CORE_SPLITS)

    # Scalar-prefetch values: row counts (for masking) and last-block indices
    # (for index_map clamping of partial / out-of-range tiles).
    scalars = jnp.array([rows_real, rows_fake, nb_real - 1, nb_fake - 1],
                        dtype=jnp.int32)

    acc_real, acc_fake = pl.pallas_call(
        partial(_jsd_sums_kernel, tile_rows=tile_rows),
        out_shape=(
            jax.ShapeDtypeStruct((_NUM_CORE_SPLITS, 8, _LANES), jnp.float32),
            jax.ShapeDtypeStruct((_NUM_CORE_SPLITS, 8, _LANES), jnp.float32),
        ),
        grid_spec=pltpu.PrefetchScalarGridSpec(
            num_scalar_prefetch=1,
            grid=(_NUM_CORE_SPLITS, tiles_per_core),
            in_specs=[
                pl.BlockSpec(
                    (tile_rows, _LANES),
                    lambda c, j, s: (jnp.minimum(c * tiles_per_core + j, s[2]), 0)),
                pl.BlockSpec(
                    (tile_rows, _LANES),
                    lambda c, j, s: (jnp.minimum(c * tiles_per_core + j, s[3]), 0)),
            ],
            out_specs=[
                pl.BlockSpec((1, 8, _LANES), lambda c, j, s: (c, 0, 0)),
                pl.BlockSpec((1, 8, _LANES), lambda c, j, s: (c, 0, 0)),
            ],
        ),
        compiler_params=pltpu.CompilerParams(
            dimension_semantics=("parallel", "arbitrary")),
    )(scalars, real2d, fake2d)

    # Tiny epilogue in plain JAX: reduce 2x(2,8,128) partial sums + scalar math.
    loss = (jnp.float32(math.log(2.0))
            + jnp.sum(acc_real) * jnp.float32(0.5 / n_real)
            + jnp.sum(acc_fake) * jnp.float32(0.5 / n_fake))
    return loss


if __name__ == "__main__":
    key = jax.random.PRNGKey(0)
    k1, k2 = jax.random.split(key)

    # Discriminator-style probability maps, NCHW = (2, 4, 16, 16), values in (0,1).
    real = jax.random.uniform(k1, (2, 4, 16, 16), dtype=jnp.float32,
                              minval=0.05, maxval=0.95)
    fake = jax.random.uniform(k2, (2, 4, 16, 16), dtype=jnp.float32,
                              minval=0.05, maxval=0.95)

    loss = jsd_loss(real, fake)
    jax.block_until_ready(loss)

    # Reference check in plain JAX (mirrors the PyTorch forward exactly).
    ref = (jnp.float32(math.log(2.0))
           + jnp.mean(jnp.log(real)) / 2.0
           + jnp.mean(jnp.log(1.0 - fake)) / 2.0)
    assert jnp.allclose(loss, ref, rtol=1e-5, atol=1e-5), (loss, ref)

    print("KERNEL_OK")
</pallas_src>

<mosaic_0001>
module attributes {stable_mosaic.version = 11 : i64} {
  func.func @_jsd_sums_kernel(%arg0: i32, %arg1: i32, %arg2: memref<4xi32, #tpu.memory_space<smem>>, %arg3: memref<16x128xf32, #tpu.memory_space<vmem>>, %arg4: memref<16x128xf32, #tpu.memory_space<vmem>>, %arg5: memref<1x8x128xf32, #tpu.memory_space<vmem>>, %arg6: memref<1x8x128xf32, #tpu.memory_space<vmem>>) attributes {dimension_semantics = [#tpu.dimension_semantics<parallel>, #tpu.dimension_semantics<arbitrary>], iteration_bounds = array<i64: 2, 1>, scalar_prefetch = 1 : i64, scratch_operands = 0 : i64, tpu.core_type = #tpu.core_type<tc>, window_params = [{transform_indices = @transform_0, window_bounds = array<i64: 16, 128>}, {transform_indices = @transform_1, window_bounds = array<i64: 16, 128>}, {transform_indices = @transform_2, window_bounds = array<i64: 1, 8, 128>}, {transform_indices = @transform_3, window_bounds = array<i64: 1, 8, 128>}]} {
    %c0_i32 = arith.constant 0 : i32
    %0 = arith.cmpi eq, %arg1, %c0_i32 : i32
    %1 = arith.extui %0 : i1 to i32
    %c0_i32_0 = arith.constant 0 : i32
    %2 = arith.cmpi ne, %1, %c0_i32_0 : i32
    scf.if %2 {
      %cst_21 = arith.constant 0.000000e+00 : f32
      %41 = vector.broadcast %cst_21 : f32 to vector<1x8x128xf32>
      %c0_22 = arith.constant 0 : index
      %c0_23 = arith.constant 0 : index
      %c0_24 = arith.constant 0 : index
      %42 = vector.load %arg5[%c0_22, %c0_23, %c0_24] : memref<1x8x128xf32, #tpu.memory_space<vmem>>, vector<1x8x128xf32>
      tpu.vector_store %arg5[%c0_22, %c0_23, %c0_24], %41 {strides = array<i32>} : memref<1x8x128xf32, #tpu.memory_space<vmem>>, vector<1x8x128xf32>,
      %cst_25 = arith.constant 0.000000e+00 : f32
      %43 = vector.broadcast %cst_25 : f32 to vector<1x8x128xf32>
      %c0_26 = arith.constant 0 : index
      %c0_27 = arith.constant 0 : index
      %c0_28 = arith.constant 0 : index
      %44 = vector.load %arg6[%c0_26, %c0_27, %c0_28] : memref<1x8x128xf32, #tpu.memory_space<vmem>>, vector<1x8x128xf32>
      tpu.vector_store %arg6[%c0_26, %c0_27, %c0_28], %43 {strides = array<i32>} : memref<1x8x128xf32, #tpu.memory_space<vmem>>, vector<1x8x128xf32>,
    } else {
    }
    %c1_i32 = arith.constant 1 : i32
    %3 = arith.muli %arg0, %c1_i32 : i32
    %4 = arith.addi %3, %arg1 : i32
    %c16_i32 = arith.constant 16 : i32
    %5 = arith.muli %4, %c16_i32 : i32
    %6 = tpu.iota {dimensions = array<i32: 0>} : vector<16x128xi32>
    %7 = vector.broadcast %5 : i32 to vector<16x128xi32>
    %8 = arith.addi %6, %7 : vector<16x128xi32>
    %c0 = arith.constant 0 : index
    %c0_1 = arith.constant 0 : index
    %9 = vector.load %arg3[%c0, %c0_1] : memref<16x128xf32, #tpu.memory_space<vmem>>, vector<16x128xf32>
    %c0_2 = arith.constant 0 : index
    %c0_3 = arith.constant 0 : index
    %10 = vector.load %arg4[%c0_2, %c0_3] : memref<16x128xf32, #tpu.memory_space<vmem>>, vector<16x128xf32>
    %c0_4 = arith.constant 0 : index
    %11 = memref.load %arg2[%c0_4] : memref<4xi32, #tpu.memory_space<smem>>
    %12 = vector.broadcast %11 : i32 to vector<16x128xi32>
    %13 = arith.cmpi slt, %8, %12 : vector<16x128xi32>
    %cst = arith.constant 1.000000e+00 : f32
    %14 = vector.broadcast %cst : f32 to vector<16x128xf32>
    %15 = arith.select %13, %9, %14 : vector<16x128xi1>, vector<16x128xf32>
    %16 = math.log %15 : vector<16x128xf32>
    %c1 = arith.constant 1 : index
    %17 = memref.load %arg2[%c1] : memref<4xi32, #tpu.memory_space<smem>>
    %18 = vector.broadcast %17 : i32 to vector<16x128xi32>
    %19 = arith.cmpi slt, %8, %18 : vector<16x128xi32>
    %cst_5 = arith.constant 1.000000e+00 : f32
    %20 = vector.broadcast %cst_5 : f32 to vector<16x128xf32>
    %21 = arith.subf %20, %10 : vector<16x128xf32>
    %cst_6 = arith.constant 1.000000e+00 : f32
    %22 = vector.broadcast %cst_6 : f32 to vector<16x128xf32>
    %23 = arith.select %19, %21, %22 : vector<16x128xi1>, vector<16x128xf32>
    %24 = math.log %23 : vector<16x128xf32>
    %c0_7 = arith.constant 0 : index
    %c0_8 = arith.constant 0 : index
    %c0_9 = arith.constant 0 : index
    %25 = vector.load %arg5[%c0_7, %c0_8, %c0_9] : memref<1x8x128xf32, #tpu.memory_space<vmem>>, vector<1x8x128xf32>
    %26 = vector.shape_cast %25 : vector<1x8x128xf32> to vector<8x128xf32>
    %27 = vector.shape_cast %16 : vector<16x128xf32> to vector<2x8x128xf32>
    %cst_10 = arith.constant dense<0.000000e+00> : vector<8x128xf32>
    %28 = vector.multi_reduction <add>, %27, %cst_10 [0] : vector<2x8x128xf32> to vector<8x128xf32>
    %29 = arith.addf %26, %28 : vector<8x128xf32>
    %c0_11 = arith.constant 0 : index
    %c0_12 = arith.constant 0 : index
    %c0_13 = arith.constant 0 : index
    %30 = vector.load %arg5[%c0_11, %c0_12, %c0_13] : memref<1x8x128xf32, #tpu.memory_space<vmem>>, vector<1x8x128xf32>
    %31 = vector.shape_cast %30 : vector<1x8x128xf32> to vector<8x128xf32>
    %32 = vector.shape_cast %29 : vector<8x128xf32> to vector<1x8x128xf32>
    tpu.vector_store %arg5[%c0_11, %c0_12, %c0_13], %32 {strides = array<i32>} : memref<1x8x128xf32, #tpu.memory_space<vmem>>, vector<1x8x128xf32>,
    %c0_14 = arith.constant 0 : index
    %c0_15 = arith.constant 0 : index
    %c0_16 = arith.constant 0 : index
    %33 = vector.load %arg6[%c0_14, %c0_15, %c0_16] : memref<1x8x128xf32, #tpu.memory_space<vmem>>, vector<1x8x128xf32>
    %34 = vector.shape_cast %33 : vector<1x8x128xf32> to vector<8x128xf32>
    %35 = vector.shape_cast %24 : vector<16x128xf32> to vector<2x8x128xf32>
    %cst_17 = arith.constant dense<0.000000e+00> : vector<8x128xf32>
    %36 = vector.multi_reduction <add>, %35, %cst_17 [0] : vector<2x8x128xf32> to vector<8x128xf32>
    %37 = arith.addf %34, %36 : vector<8x128xf32>
    %c0_18 = arith.constant 0 : index
    %c0_19 = arith.constant 0 : index
    %c0_20 = arith.constant 0 : index
    %38 = vector.load %arg6[%c0_18, %c0_19, %c0_20] : memref<1x8x128xf32, #tpu.memory_space<vmem>>, vector<1x8x128xf32>
    %39 = vector.shape_cast %38 : vector<1x8x128xf32> to vector<8x128xf32>
    %40 = vector.shape_cast %37 : vector<8x128xf32> to vector<1x8x128xf32>
    tpu.vector_store %arg6[%c0_18, %c0_19, %c0_20], %40 {strides = array<i32>} : memref<1x8x128xf32, #tpu.memory_space<vmem>>, vector<1x8x128xf32>,
    return
  }
  func.func @transform_0(%arg0: i32, %arg1: i32, %arg2: memref<4xi32, #tpu.memory_space<smem>>) -> (i32, i32) {
    %c1_i32 = arith.constant 1 : i32
    %0 = arith.muli %arg0, %c1_i32 : i32
    %1 = arith.addi %0, %arg1 : i32
    %c2 = arith.constant 2 : index
    %2 = memref.load %arg2[%c2] : memref<4xi32, #tpu.memory_space<smem>>
    %3 = arith.minsi %1, %2 : i32
    %c0_i32 = arith.constant 0 : i32
    %c0_i32_0 = arith.constant 0 : i32
    return %3, %c0_i32 : i32, i32
  }
  func.func @transform_1(%arg0: i32, %arg1: i32, %arg2: memref<4xi32, #tpu.memory_space<smem>>) -> (i32, i32) {
    %c1_i32 = arith.constant 1 : i32
    %0 = arith.muli %arg0, %c1_i32 : i32
    %1 = arith.addi %0, %arg1 : i32
    %c3 = arith.constant 3 : index
    %2 = memref.load %arg2[%c3] : memref<4xi32, #tpu.memory_space<smem>>
    %3 = arith.minsi %1, %2 : i32
    %c0_i32 = arith.constant 0 : i32
    %c0_i32_0 = arith.constant 0 : i32
    return %3, %c0_i32 : i32, i32
  }
  func.func @transform_2(%arg0: i32, %arg1: i32, %arg2: memref<4xi32, #tpu.memory_space<smem>>) -> (i32, i32, i32) {
    %c0_i32 = arith.constant 0 : i32
    %c0_i32_0 = arith.constant 0 : i32
    %c0_i32_1 = arith.constant 0 : i32
    return %arg0, %c0_i32, %c0_i32_0 : i32, i32, i32
  }
  func.func @transform_3(%arg0: i32, %arg1: i32, %arg2: memref<4xi32, #tpu.memory_space<smem>>) -> (i32, i32, i32) {
    %c0_i32 = arith.constant 0 : i32
    %c0_i32_0 = arith.constant 0 : i32
    %c0_i32_1 = arith.constant 0 : i32
    return %arg0, %c0_i32, %c0_i32_0 : i32, i32, i32
  }
}

</mosaic_0001>

<llo_original>
// kernel: jsd_loss.1
$region0: #{jsd_loss.1}
  #allocation0 [shape = 'u32[]', space=smem, size = 0x4, offset = 0x4, fixed_abs, tag = 'smem constant byte address 0x4 - core index']
  #allocation1 [shape = 'u32[144,128]{1,0:T(1,128)}', space=vmem, size = 0x12000, scoped, tag = 'internal scratch']
  #allocation2 [shape = 's32[1]{0}', space=sflag, size = 0x4, scoped, tag = 'scoped memory for jsd_loss.1']
  #allocation3 [shape = 'u8[512]{0}', space=smem, size = 0x200, scoped, tag = 'prefetched SMEM operand 0']
  %s0 = inlined_call_operand.vmem [shape: s32[4], index: 0, kind: input, shape index: {}]
  %s1 = inlined_call_operand.vmem [shape: f32[16,128], index: 1, kind: input, shape index: {}]
  %s2 = inlined_call_operand.vmem [shape: f32[16,128], index: 2, kind: input, shape index: {}]
  %s3 = inlined_call_operand.vmem [shape: f32[2,8,128], index: 3, kind: output, shape index: {0}]
  %s4 = inlined_call_operand.vmem [shape: f32[2,8,128], index: 4, kind: output, shape index: {1}]
  %5 = xla_tuple %s3, %s4
  %s6 = sld [smem:[#allocation0]]
  $region53: #{jsd_loss.1} parent=0
    _
  %s8 = ssub.s32 1, %s6
  %s9 = scalar_select 0, %s8, %s6
  %s10 = sshll.u32 %s0, 4
  %s11 = int_to_ptr.vmem [resolvable:$true] %s10
  %13 = dma.vmem_to_smem %s11, 16, [#allocation3], [#allocation2]
  %14 = dma.done [#allocation2], 16
  %15 = sfence
  loop: start=0, step=1, limit=4
  $region2: #{jsd_loss.1} parent=0 // loop_pre_header
    _
  $region3: #{jsd_loss.1} parent=0 // loop_header
    %s17 = sphi 0, %s21
    %p18 = scmp.ge.s32.totalorder %s17, 4
    %s24 = sphi 0, %s36
    %s25 = sphi 0, %s32
    %s26 = sphi 0, %s24
    %s27 = sphi 0, %s25
    %s28 = sphi 0, %s26
    %s29 = sphi 0, %s27
    %s47 = sphi 0, %s49
    %s50 = sphi 0, %s47
    %s51 = sphi 0, %s50
    %s67 = sphi 0, %s51
    %s81 = sphi 0, %s83
    %s84 = sphi 0, %s81
    %s85 = sphi 0, %s84
    %s101 = sphi 0, %s85
    %s107 = sphi 0, %s109
    %s110 = sphi 0, %s107
    %s111 = sphi 0, %s110
    %s127 = sphi 0, %s111
    %s133 = sphi 0, %s135
    %s136 = sphi 0, %s133
    %s137 = sphi 0, %s136
    %s153 = sphi 0, %s137
  $region4: #{jsd_loss.1} parent=0 // loop_header_branch
    %20 = sbr.rel (%p18) target = $region8
  $region5: #{jsd_loss.1} parent=0 // loop_body
    %s22 = ssub.s32 %s17, 1
    %s23 = ssub.s32 %s17, 2
    %s30 = sadd.s32 1, %s25
    %p31 = scmp.ge.s32.totalorder %s30, 1
    %s32 = scalar_select %p31, 0, %s30
    %s33 = sadd.s32 1, %s24
    %s34 = scalar_select %p31, %s33, %s24
    %p35 = scmp.ge.s32.totalorder %s34, 2
    %s36 = scalar_select %p35, 0, %s34
    %s37 = sadd.s32 %s24, %s25
    %s38 = sld [smem:[#allocation3 + $0x2]]
    %p39 = scmp.lt.s32.totalorder %s37, %s38
    %s40 = scalar_select %p39, %s37, %s38
    %s41 = sadd.s32 %s36, %s32
    %s42 = sld [smem:[#allocation3 + $0x2]]
    %p43 = scmp.lt.s32.totalorder %s41, %s42
    %s44 = scalar_select %p43, %s41, %s42
    %s45 = ssub.s32 %s40, %s44
    %p46 = scmp.eq.s32.totalorder %s45, 0
    %s48 = sadd.s32 %s47, 1
    %s49 = scalar_select %p46, %s47, %s48
    %p52 = pneg %p46
    %p53 = scmp.eq.s32.totalorder %s17, 1
    %p54 = por %p52, %p53
    %p55 = scmp.ne.s32.totalorder %s47, %s50
    %p56 = scmp.eq.s32.totalorder %s17, 0
    %p57 = por %p55, %p56
    %p58 = scmp.ne.s32.totalorder %s47, %s50
    %p59 = scmp.eq.s32.totalorder %s22, 1
    %p60 = por %p58, %p59
    %p61 = scmp.ne.s32.totalorder %s50, %s51
    %p62 = scmp.eq.s32.totalorder %s22, 0
    %p63 = por %p61, %p62
    %p64 = scmp.ne.s32.totalorder %s50, %s51
    %p65 = scmp.eq.s32.totalorder %s23, 1
    %p66 = por %p64, %p65
    %p68 = scmp.ne.s32.totalorder %s51, %s67
    %p69 = scmp.eq.s32.totalorder %s23, 0
    %p70 = por %p68, %p69
    %s71 = sadd.s32 %s24, %s25
    %s72 = sld [smem:[#allocation3 + $0x3]]
    %p73 = scmp.lt.s32.totalorder %s71, %s72
    %s74 = scalar_select %p73, %s71, %s72
    %s75 = sadd.s32 %s36, %s32
    %s76 = sld [smem:[#allocation3 + $0x3]]
    %p77 = scmp.lt.s32.totalorder %s75, %s76
    %s78 = scalar_select %p77, %s75, %s76
    %s79 = ssub.s32 %s74, %s78
    %p80 = scmp.eq.s32.totalorder %s79, 0
    %s82 = sadd.s32 %s81, 1
    %s83 = scalar_select %p80, %s81, %s82
    %p86 = pneg %p80
    %p87 = scmp.eq.s32.totalorder %s17, 1
    %p88 = por %p86, %p87
    %p89 = scmp.ne.s32.totalorder %s81, %s84
    %p90 = scmp.eq.s32.totalorder %s17, 0
    %p91 = por %p89, %p90
    %p92 = scmp.ne.s32.totalorder %s81, %s84
    %p93 = scmp.eq.s32.totalorder %s22, 1
    %p94 = por %p92, %p93
    %p95 = scmp.ne.s32.totalorder %s84, %s85
    %p96 = scmp.eq.s32.totalorder %s22, 0
    %p97 = por %p95, %p96
    %p98 = scmp.ne.s32.totalorder %s84, %s85
    %p99 = scmp.eq.s32.totalorder %s23, 1
    %p100 = por %p98, %p99
    %p102 = scmp.ne.s32.totalorder %s85, %s101
    %p103 = scmp.eq.s32.totalorder %s23, 0
    %p104 = por %p102, %p103
    %s105 = ssub.s32 %s24, %s36
    %p106 = scmp.eq.s32.totalorder %s105, 0
    %s108 = sadd.s32 %s107, 1
    %s109 = scalar_select %p106, %s107, %s108
    %p112 = pneg %p106
    %p113 = scmp.eq.s32.totalorder %s17, 1
    %p114 = por %p112, %p113
    %p115 = scmp.ne.s32.totalorder %s107, %s110
    %p116 = scmp.eq.s32.totalorder %s17, 0
    %p117 = por %p115, %p116
    %p118 = scmp.ne.s32.totalorder %s107, %s110
    %p119 = scmp.eq.s32.totalorder %s22, 1
    %p120 = por %p118, %p119
    %p121 = scmp.ne.s32.totalorder %s110, %s111
    %p122 = scmp.eq.s32.totalorder %s22, 0
    %p123 = por %p121, %p122
    %p124 = scmp.ne.s32.totalorder %s110, %s111
    %p125 = scmp.eq.s32.totalorder %s23, 1
    %p126 = por %p124, %p125
    %p128 = scmp.ne.s32.totalorder %s111, %s127
    %p129 = scmp.eq.s32.totalorder %s23, 0
    %p130 = por %p128, %p129
    %s131 = ssub.s32 %s24, %s36
    %p132 = scmp.eq.s32.totalorder %s131, 0
    %s134 = sadd.s32 %s133, 1
    %s135 = scalar_select %p132, %s133, %s134
    %p138 = pneg %p132
    %p139 = scmp.eq.s32.totalorder %s17, 1
    %p140 = por %p138, %p139
    %p141 = scmp.ne.s32.totalorder %s133, %s136
    %p142 = scmp.eq.s32.totalorder %s17, 0
    %p143 = por %p141, %p142
    %p144 = scmp.ne.s32.totalorder %s133, %s136
    %p145 = scmp.eq.s32.totalorder %s22, 1
    %p146 = por %p144, %p145
    %p147 = scmp.ne.s32.totalorder %s136, %s137
    %p148 = scmp.eq.s32.totalorder %s22, 0
    %p149 = por %p147, %p148
    %p150 = scmp.ne.s32.totalorder %s136, %s137
    %p151 = scmp.eq.s32.totalorder %s23, 1
    %p152 = por %p150, %p151
    %p154 = scmp.ne.s32.totalorder %s137, %s153
    %p155 = scmp.eq.s32.totalorder %s23, 0
    %p156 = por %p154, %p155
    %p157 = scmp.le.s32.totalorder 1, %s17
    %p158 = scmp.lt.s32.totalorder %s17, 3
    %p159 = pnand %p157, %p158
    %p160 = pneg %p159
    // Predicated region
    $region9: #{jsd_loss.1} parent=5 // pred_check
      _
    $region10: #{jsd_loss.1} parent=5 // pred_check_branch
      %162 = sbr.rel (%p159) target = $region12
    $region11: #{jsd_loss.1} parent=5 // pred_region
      %s163 = ssub.s32 %s17, 1
    $region12: #{jsd_loss.1} parent=5 // pred_fallthru
      _
    %p164 = scmp.lt.s32.totalorder %s17, 2
    // Predicated region
    $region13: #{jsd_loss.1} parent=5 // pred_check
      %p165 = pneg %p164
    $region14: #{jsd_loss.1} parent=5 // pred_check_branch
      %167 = sbr.rel (%p165) target = $region16
    $region15: #{jsd_loss.1} parent=5 // pred_region
      // Predicated region
      $region17: #{jsd_loss.1} parent=15 // pred_check
        %p168 = pneg %p57
      $region18: #{jsd_loss.1} parent=15 // pred_check_branch
        %170 = sbr.rel (%p168) target = $region20
      $region19: #{jsd_loss.1} parent=15 // pred_region
        %s171 = sadd.s32 %s24, %s25
        %s172 = sld [smem:[#allocation3 + $0x2]]
        %p173 = scmp.lt.s32.totalorder %s171, %s172
        %s174 = scalar_select %p173, %s171, %s172
        %s175 = smul.u32 2, %s174
        %p176 = scmp.lt.s32.totalorder %s175, 1
        %s177 = scalar_select %p176, %s175, 1
        %s178 = smul.addr %s177, 8
        %s179 = scalar_lea.vmem %s1, %s178
        %s180 = sadd.s32 %s24, %s25
        %s181 = sld [smem:[#allocation3 + $0x2]]
        %p182 = scmp.lt.s32.totalorder %s180, %s181
        %s183 = scalar_select %p182, %s180, %s181
        %s184 = smul.u32 2, %s183
      $region20: #{jsd_loss.1} parent=15 // pred_fallthru
        _
      // Predicated region
      $region21: #{jsd_loss.1} parent=15 // pred_check
        %p185 = pneg %p91
      $region22: #{jsd_loss.1} parent=15 // pred_check_branch
        %187 = sbr.rel (%p185) target = $region24
      $region23: #{jsd_loss.1} parent=15 // pred_region
        %s188 = sadd.s32 %s24, %s25
        %s189 = sld [smem:[#allocation3 + $0x3]]
        %p190 = scmp.lt.s32.totalorder %s188, %s189
        %s191 = scalar_select %p190, %s188, %s189
        %s192 = smul.u32 2, %s191
        %p193 = scmp.lt.s32.totalorder %s192, 1
        %s194 = scalar_select %p193, %s192, 1
        %s195 = smul.addr %s194, 8
        %s196 = scalar_lea.vmem %s2, %s195
        %s197 = sadd.s32 %s24, %s25
        %s198 = sld [smem:[#allocation3 + $0x3]]
        %p199 = scmp.lt.s32.totalorder %s197, %s198
        %s200 = scalar_select %p199, %s197, %s198
        %s201 = smul.u32 2, %s200
      $region24: #{jsd_loss.1} parent=15 // pred_fallthru
        _
    $region16: #{jsd_loss.1} parent=5 // pred_fallthru
      _
    %p202 = scmp.le.s32.totalorder 1, %s17
    %p203 = scmp.lt.s32.totalorder %s17, 3
    %p204 = pnand %p202, %p203
    %p205 = pneg %p204
    // Predicated region
    $region25: #{jsd_loss.1} parent=5 // pred_check
      _
    $region26: #{jsd_loss.1} parent=5 // pred_check_branch
      %207 = sbr.rel (%p204) target = $region28
    $region27: #{jsd_loss.1} parent=5 // pred_region
      %s208 = ssub.s32 %s17, 1
      %s209 = sadd.s32 %s26, %s27
      %s210 = sld [smem:[#allocation3 + $0x2]]
      %p211 = scmp.lt.s32.totalorder %s209, %s210
      %s212 = scalar_select %p211, %s209, %s210
      %s213 = smul.u32 2, %s212
      %p214 = scmp.lt.s32.totalorder %s213, 1
      %s215 = scalar_select %p214, %s213, 1
      %s216 = smul.addr %s215, 8
      %s217 = scalar_lea.vmem %s1, %s216
      %p218 = pneg %p63
      %p219 = pneg %p60
      %s220 = sadd.s32 %s26, %s27
      %s221 = sld [smem:[#allocation3 + $0x3]]
      %p222 = scmp.lt.s32.totalorder %s220, %s221
      %s223 = scalar_select %p222, %s220, %s221
      %s224 = smul.u32 2, %s223
      %p225 = scmp.lt.s32.totalorder %s224, 1
      %s226 = scalar_select %p225, %s224, 1
      %s227 = smul.addr %s226, 8
      %s228 = scalar_lea.vmem %s2, %s227
      %p229 = pneg %p97
      %p230 = pneg %p94
      %p231 = pneg %p123
      %p232 = pneg %p120
      %p233 = scmp.lt.s32.totalorder %s26, 1
      %s234 = scalar_select %p233, %s26, 1
      %s235 = smul.addr %s234, 8
      %s236 = scalar_lea.vmem %s3, %s235
      %p237 = pneg %p149
      %p238 = pneg %p146
      %p239 = scmp.lt.s32.totalorder %s26, 1
      %s240 = scalar_select %p239, %s26, 1
      %s241 = smul.addr %s240, 8
      %s242 = scalar_lea.vmem %s4, %s241
      %s243 = sadd.s32 %s26, %s27
      %s244 = sld [smem:[#allocation3 + $0x2]]
      %p245 = scmp.lt.s32.totalorder %s243, %s244
      %s246 = scalar_select %p245, %s243, %s244
      %s247 = smul.u32 2, %s246
      %p248 = scmp.lt.s32.totalorder %s247, 1
      %s249 = scalar_select %p248, %s247, 1
      %s250 = smul.addr %s249, 8
      %s251 = scalar_lea.vmem %s1, %s250
      %s252 = sadd.s32 %s26, %s27
      %s253 = sld [smem:[#allocation3 + $0x2]]
      %p254 = scmp.lt.s32.totalorder %s252, %s253
      %s255 = scalar_select %p254, %s252, %s253
      %s256 = smul.u32 2, %s255
      %s257 = sadd.s32 %s26, %s27
      %s258 = sld [smem:[#allocation3 + $0x3]]
      %p259 = scmp.lt.s32.totalorder %s257, %s258
      %s260 = scalar_select %p259, %s257, %s258
      %s261 = smul.u32 2, %s260
      %p262 = scmp.lt.s32.totalorder %s261, 1
      %s263 = scalar_select %p262, %s261, 1
      %s264 = smul.addr %s263, 8
      %s265 = scalar_lea.vmem %s2, %s264
      %s266 = sadd.s32 %s26, %s27
      %s267 = sld [smem:[#allocation3 + $0x3]]
      %p268 = scmp.lt.s32.totalorder %s266, %s267
      %s269 = scalar_select %p268, %s266, %s267
      %s270 = smul.u32 2, %s269
      %p271 = scmp.lt.s32.totalorder %s26, 1
      %s272 = scalar_select %p271, %s26, 1
      %s273 = smul.addr %s272, 8
      %s274 = scalar_lea.vmem %s3, %s273
      %p275 = scmp.lt.s32.totalorder %s26, 1
      %s276 = scalar_select %p275, %s26, 1
      %s277 = smul.addr %s276, 8
      %s278 = scalar_lea.vmem %s4, %s277
      %p279 = scmp.eq.s32.totalorder %s27, 0
      // Predicated region
      $region29: #{jsd_loss.1} parent=27 // pred_check
        %p280 = pneg %p279
      $region30: #{jsd_loss.1} parent=27 // pred_check_branch
        %282 = sbr.rel (%p280) target = $region32
      $region31: #{jsd_loss.1} parent=27 // pred_region
        %283 = vst [vmem:[%s274] sm:$0xff] 0.0
        %284 = vst [vmem:[%s278] sm:$0xff] 0.0
      $region32: #{jsd_loss.1} parent=27 // pred_fallthru
        _
      %s285 = sadd.s32 %s26, %s27
      %s286 = smul.u32 %s285, 16
      %v287 = vlaneseq
      %v288 = vshrl.u32 %v287, 7
      %v289 = vadd.s32 %v288, 8
      %v290 = vstv %s286
      %v291 = vadd.s32 %v288, %v290
      %v292 = vadd.s32 %v289, %v290
      %v293 = vld [vmem:[%s251] sm:$0xff]
      %v294 = vld [vmem:[%s251 + $0x8] sm:$0xff]
      %v295 = vld [vmem:[%s265] sm:$0xff]
      %v296 = vld [vmem:[%s265 + $0x8] sm:$0xff]
      %s297 = sld [smem:[#allocation3]]
      %v298 = vstv %s297
      %vm299 = vcmp.lt.s32.totalorder %v291, %v298
      %vm300 = vcmp.lt.s32.totalorder %v292, %v298
      %v301 = vsel %vm299, %v293, 1.0
      %v302 = vsel %vm300, %v294, 1.0
      %v303 = vlog2.pop %v301
      %v304 = vmul.f32 %v303, 0.6931472
      %v305 = vlog2.pop %v302
      %v306 = vmul.f32 %v305, 0.6931472
      %s307 = sld [smem:[#allocation3 + $0x1]]
      %v308 = vstv %s307
      %vm309 = vcmp.lt.s32.totalorder %v291, %v308
      %vm310 = vcmp.lt.s32.totalorder %v292, %v308
      %v311 = vsub.f32 1.0, %v295
      %v312 = vsub.f32 1.0, %v296
      %v313 = vsel %vm309, %v311, 1.0
      %v314 = vsel %vm310, %v312, 1.0
      %v315 = vlog2.pop %v313
      %v316 = vmul.f32 %v315, 0.6931472
      %v317 = vlog2.pop %v314
      %v318 = vmul.f32 %v317, 0.6931472
      %v319 = vld [vmem:[%s274] sm:$0xff]
      %v320 = vadd.f32 %v304, %v306
      %v321 = vadd.f32 %v319, %v320
      %322 = vst [vmem:[%s274] sm:$0xff] %v321
      %v323 = vld [vmem:[%s278] sm:$0xff]
      %v324 = vadd.f32 %v316, %v318
      %v325 = vadd.f32 %v323, %v324
      %326 = vst [vmem:[%s278] sm:$0xff] %v325
      %p327 = scmp.lt.s32.totalorder %s26, 1
      %s328 = scalar_select %p327, %s26, 1
      %s329 = smul.addr %s328, 8
      %s330 = scalar_lea.vmem %s3, %s329
      %p331 = scmp.lt.s32.totalorder %s26, 1
      %s332 = scalar_select %p331, %s26, 1
      %s333 = smul.addr %s332, 8
      %s334 = scalar_lea.vmem %s4, %s333
      // Predicated region
      $region33: #{jsd_loss.1} parent=27 // pred_check
        %p335 = pneg %p120
      $region34: #{jsd_loss.1} parent=27 // pred_check_branch
        %337 = sbr.rel (%p335) target = $region36
      $region35: #{jsd_loss.1} parent=27 // pred_region
        _
      $region36: #{jsd_loss.1} parent=27 // pred_fallthru
        _
      // Predicated region
      $region37: #{jsd_loss.1} parent=27 // pred_check
        %p338 = pneg %p146
      $region38: #{jsd_loss.1} parent=27 // pred_check_branch
        %340 = sbr.rel (%p338) target = $region40
      $region39: #{jsd_loss.1} parent=27 // pred_region
        _
      $region40: #{jsd_loss.1} parent=27 // pred_fallthru
        _
    $region28: #{jsd_loss.1} parent=5 // pred_fallthru
      _
    %p341 = scmp.le.s32.totalorder 2, %s17
    // Predicated region
    $region41: #{jsd_loss.1} parent=5 // pred_check
      %p342 = pneg %p341
    $region42: #{jsd_loss.1} parent=5 // pred_check_branch
      %344 = sbr.rel (%p342) target = $region44
    $region43: #{jsd_loss.1} parent=5 // pred_region
      %s345 = ssub.s32 %s17, 2
      // Predicated region
      $region45: #{jsd_loss.1} parent=43 // pred_check
        %p346 = pneg %p126
      $region46: #{jsd_loss.1} parent=43 // pred_check_branch
        %348 = sbr.rel (%p346) target = $region48
      $region47: #{jsd_loss.1} parent=43 // pred_region
        %p349 = scmp.lt.s32.totalorder %s28, 1
        %s350 = scalar_select %p349, %s28, 1
        %s351 = smul.addr %s350, 8
        %s352 = scalar_lea.vmem %s3, %s351
      $region48: #{jsd_loss.1} parent=43 // pred_fallthru
        _
      // Predicated region
      $region49: #{jsd_loss.1} parent=43 // pred_check
        %p353 = pneg %p152
      $region50: #{jsd_loss.1} parent=43 // pred_check_branch
        %355 = sbr.rel (%p353) target = $region52
      $region51: #{jsd_loss.1} parent=43 // pred_region
        %p356 = scmp.lt.s32.totalorder %s28, 1
        %s357 = scalar_select %p356, %s28, 1
        %s358 = smul.addr %s357, 8
        %s359 = scalar_lea.vmem %s4, %s358
      $region52: #{jsd_loss.1} parent=43 // pred_fallthru
        _
    $region44: #{jsd_loss.1} parent=5 // pred_fallthru
      _
  $region6: #{jsd_loss.1} parent=0 // loop_footer
    %s21 = sadd.s32 1, %s17
  $region7: #{jsd_loss.1} parent=0 // loop_footer_branch
    %16 = sbr.rel target = $region3
  $region8: #{jsd_loss.1} parent=0 // loop_exit
    _

</llo_original>
